<compile_context>
chip_gen: v7x
topology: tpu7x:2x2x1
jax: 0.10.0
libtpu: 0.0.40
codegen_flags: <defaults>
</compile_context>

<pallas_src>
import jax
import jax.numpy as jnp
from jax.experimental import pallas as pl
from jax.experimental.pallas import tpu as pltpu

KH = 3            # conv kernel height (fixed by the module)
C_OUT = 30        # conv out_channels (fixed by the module)
C_PAD = 128       # lane-dense padded channel count
MAX_BT_TILE = 256 # upper bound on the batch tile (multiple of 8)


def _round_up(x, m):
    return ((x + m - 1) // m) * m


def experimental_kernel(embeds_ref, w_ref, bias_ref, out_ref):
    # embeds_ref: (Bt, T, E); w_ref: (3E, C_PAD); bias_ref: (1, C_PAD); out_ref: (Bt, C_PAD)
    Bt, T, E = embeds_ref.shape
    Cp = w_ref.shape[1]
    Tc = T - (KH - 1)                       # number of valid conv positions

    x = embeds_ref[...]
    # im2col LHS from pre-shifted slices of the *small* input, then one fused
    # K=3E MXU matmul for all three conv taps.
    lhs = jnp.concatenate(
        [x[:, 0:Tc, :], x[:, 1:Tc + 1, :], x[:, 2:Tc + 2, :]], axis=-1
    ).reshape(Bt * Tc, KH * E)

    acc = jnp.dot(lhs, w_ref[...], preferred_element_type=jnp.float32)
    acc = acc.reshape(Bt, Tc, Cp)

    # MaxPool over time first, then bias + ReLU (algebraically exact reorder).
    pooled = jnp.max(acc, axis=1)                              # (Bt, C_PAD)
    out_ref[...] = jnp.maximum(pooled + bias_ref[...], 0.0)


def experimental_network_forward(x_ids, embedding_table, conv_weight, conv_bias,
                                 *, use_bf16=False):
    """Equivalent of ExperimentalNetwork.forward(x); x int ids of shape (B, T), B > 1, T > 2."""
    B, T = x_ids.shape
    E = embedding_table.shape[1]
    C = conv_weight.shape[0]
    Tc = T - (KH - 1)

    in_dtype = jnp.bfloat16 if use_bf16 else jnp.float32  # bf16 matmul operands optional (v6e/v7x)

    # Batch tile: as large as possible (multiple of 8), capped so the
    # (bt_tile, Tc, 128) f32 matmul result stays under ~8 MiB.
    Bp8 = _round_up(B, 8)
    max_by_acc = max(8, ((8 * 1024 * 1024) // max(Tc * C_PAD * 4, 1)) // 8 * 8)
    bt_tile = min(MAX_BT_TILE, Bp8, max_by_acc)
    Bp = _round_up(B, bt_tile)

    # Pad only the cheap int32 ids (index 0 is valid); the embedding gather then
    # produces the padded activation directly -- no jnp.pad pass over (B, T, E).
    if Bp != B:
        x_ids = jnp.pad(x_ids, ((0, Bp - B), (0, 0)))
    # TODO(synk): the frozen nn.Embedding gather stays in XLA glue; an in-kernel
    # DMA row-gather is only worthwhile for much larger embedding rows.
    embeds = embedding_table[x_ids].astype(in_dtype)           # (Bp, T, E)

    # Fused (k, e)-major weight: w_fused[k*E + e, c] = conv_weight[c, 0, k, e].
    w_fused = conv_weight.reshape(C, KH * E).T                 # (3E, C)
    w_fused = jnp.pad(w_fused, ((0, 0), (0, C_PAD - C))).astype(in_dtype)
    bias_p = jnp.pad(conv_bias, (0, C_PAD - C)).reshape(1, C_PAD).astype(jnp.float32)

    # Explicit VMEM budget: double-buffered blocks + f32 intermediates + headroom,
    # kept under v7x's 64 MiB physical VMEM.
    itemsize = jnp.dtype(in_dtype).itemsize
    in_blk = bt_tile * T * E * itemsize
    w_blk = KH * E * C_PAD * itemsize
    out_blk = bt_tile * C_PAD * 4
    acc_blk = bt_tile * Tc * C_PAD * 4
    need = 2 * (in_blk + w_blk + C_PAD * 4 + out_blk) + 2 * acc_blk
    vmem_limit = int(min(max(4 * need, 16 * 1024 * 1024), 48 * 1024 * 1024))

    # TODO(synk): for very long sequences, add a second ("arbitrary") grid axis
    # over time chunks with a running-max VMEM accumulator; unnecessary at these T.
    grid = (Bp // bt_tile,)
    out_p = pl.pallas_call(
        experimental_kernel,
        out_shape=jax.ShapeDtypeStruct((Bp, C_PAD), jnp.float32),
        grid_spec=pltpu.PrefetchScalarGridSpec(
            num_scalar_prefetch=0,
            grid=grid,
            in_specs=[
                pl.BlockSpec((bt_tile, T, E), lambda b: (b, 0, 0)),
                pl.BlockSpec((KH * E, C_PAD), lambda b: (0, 0)),
                pl.BlockSpec((1, C_PAD), lambda b: (0, 0)),
            ],
            out_specs=pl.BlockSpec((bt_tile, C_PAD), lambda b: (b, 0)),
        ),
        compiler_params=pltpu.CompilerParams(
            dimension_semantics=("parallel",),
            vmem_limit_bytes=vmem_limit,
        ),
    )(embeds, w_fused, bias_p)

    # Discard batch/channel padding; output matches torch's returned out2: (B, 30).
    return out_p[:B, :C]


def _reference_forward(x_ids, embedding_table, conv_weight, conv_bias):
    """Pure-JAX reference replicating ExperimentalNetwork.forward (returns out2)."""
    embeds = embedding_table[x_ids].astype(jnp.float32)        # (B, T, E)
    B, T, E = embeds.shape
    C = conv_weight.shape[0]
    Tc = T - (KH - 1)
    w_flat = conv_weight.reshape(C, KH * E)                    # (C, 3E), (k, e) order
    windows = jnp.stack(
        [embeds[:, t:t + KH, :].reshape(B, KH * E) for t in range(Tc)], axis=1)  # (B, Tc, 3E)
    conv = jnp.einsum("btk,ck->btc", windows, w_flat) + conv_bias  # (B, Tc, C)
    out1 = jnp.maximum(conv, 0.0)
    return jnp.max(out1, axis=1)                               # (B, C) == torch out2


if __name__ == "__main__":
    # Small deterministic config consistent with the module.
    VOCAB, E, B, T, NUM_LABELS = 50, 16, 2, 8, 5

    key = jax.random.PRNGKey(0)
    k_emb, k_w, k_b, k_ids = jax.random.split(key, 4)

    embedding_table = jax.random.normal(k_emb, (VOCAB, E), jnp.float32)

    fan_in = 1 * KH * E
    scale = 1.0 / jnp.sqrt(fan_in)
    conv_weight = jax.random.uniform(k_w, (C_OUT, 1, KH, E), jnp.float32, -scale, scale)
    conv_bias = jax.random.uniform(k_b, (C_OUT,), jnp.float32, -scale, scale)
    # The module also owns nn.Linear(30, num_labels); forward() discards its result,
    # so no linear parameters are needed for the returned output.

    x_ids = jax.random.randint(k_ids, (B, T), 0, VOCAB, dtype=jnp.int32)

    out = experimental_network_forward(x_ids, embedding_table, conv_weight, conv_bias)
    out = jax.block_until_ready(out)

    ref = _reference_forward(x_ids, embedding_table, conv_weight, conv_bias)
    assert out.shape == (B, C_OUT)
    assert jnp.allclose(out, ref, atol=1e-3, rtol=1e-3), "mismatch vs reference"

    print("KERNEL_OK")
</pallas_src>

<mosaic_0001>
module attributes {stable_mosaic.version = 11 : i64} {
  func.func @experimental_kernel(%arg0: i32, %arg1: memref<8x8x16xf32, #tpu.memory_space<vmem>>, %arg2: memref<48x128xf32, #tpu.memory_space<vmem>>, %arg3: memref<1x128xf32, #tpu.memory_space<vmem>>, %arg4: memref<8x128xf32, #tpu.memory_space<vmem>>) attributes {dimension_semantics = [#tpu.dimension_semantics<parallel>], iteration_bounds = array<i64: 1>, scalar_prefetch = 0 : i64, scratch_operands = 0 : i64, tpu.core_type = #tpu.core_type<tc>, window_params = [{transform_indices = @transform_0, window_bounds = array<i64: 8, 8, 16>}, {pipeline_mode = #tpu.pipeline_mode<synchronous>, transform_indices = @transform_1, window_bounds = array<i64: 48, 128>}, {pipeline_mode = #tpu.pipeline_mode<synchronous>, transform_indices = @transform_2, window_bounds = array<i64: 1, 128>}, {transform_indices = @transform_3, window_bounds = array<i64: 8, 128>}]} {
    %c0 = arith.constant 0 : index
    %c0_0 = arith.constant 0 : index
    %c0_1 = arith.constant 0 : index
    %0 = vector.load %arg1[%c0, %c0_0, %c0_1] : memref<8x8x16xf32, #tpu.memory_space<vmem>>, vector<8x8x16xf32>
    %1 = vector.extract_strided_slice %0 {offsets = [0, 0, 0], sizes = [8, 6, 16], strides = [1, 1, 1]} : vector<8x8x16xf32> to vector<8x6x16xf32>
    %2 = vector.extract_strided_slice %0 {offsets = [0, 1, 0], sizes = [8, 6, 16], strides = [1, 1, 1]} : vector<8x8x16xf32> to vector<8x6x16xf32>
    %3 = vector.extract_strided_slice %0 {offsets = [0, 2, 0], sizes = [8, 6, 16], strides = [1, 1, 1]} : vector<8x8x16xf32> to vector<8x6x16xf32>
    %4 = tpu.concatenate %1, %2, %3 in 2 : vector<8x6x16xf32>, vector<8x6x16xf32>, vector<8x6x16xf32> -> vector<8x6x48xf32>
    %5 = vector.shape_cast %4 : vector<8x6x48xf32> to vector<48x48xf32>
    %c0_2 = arith.constant 0 : index
    %c0_3 = arith.constant 0 : index
    %6 = vector.load %arg2[%c0_2, %c0_3] : memref<48x128xf32, #tpu.memory_space<vmem>>, vector<48x128xf32>
    %cst = arith.constant dense<0.000000e+00> : vector<48x128xf32>
    %7 = tpu.matmul %5, %6, %cst {dimension_numbers = #tpu.dot_dimension_numbers<[1], [0], [0], [1], [0, 0, 1, 1], [], []>} : vector<48x48xf32>, vector<48x128xf32>, vector<48x128xf32> -> vector<48x128xf32>
    %8 = vector.shape_cast %7 : vector<48x128xf32> to vector<8x6x128xf32>
    %cst_4 = arith.constant dense<0xFF800000> : vector<8x128xf32>
    %9 = vector.multi_reduction <maximumf>, %8, %cst_4 [1] : vector<8x6x128xf32> to vector<8x128xf32>
    %c0_5 = arith.constant 0 : index
    %c0_6 = arith.constant 0 : index
    %10 = vector.load %arg3[%c0_5, %c0_6] : memref<1x128xf32, #tpu.memory_space<vmem>>, vector<1x128xf32>
    %11 = vector.broadcast %10 : vector<1x128xf32> to vector<8x128xf32>
    %12 = arith.addf %9, %11 : vector<8x128xf32>
    %cst_7 = arith.constant 0.000000e+00 : f32
    %13 = vector.broadcast %cst_7 : f32 to vector<8x128xf32>
    %14 = arith.maximumf %12, %13 : vector<8x128xf32>
    %c0_8 = arith.constant 0 : index
    %c0_9 = arith.constant 0 : index
    %15 = vector.load %arg4[%c0_8, %c0_9] : memref<8x128xf32, #tpu.memory_space<vmem>>, vector<8x128xf32>
    tpu.vector_store %arg4[%c0_8, %c0_9], %14 {strides = array<i32>} : memref<8x128xf32, #tpu.memory_space<vmem>>, vector<8x128xf32>,
    return
  }
  func.func @transform_0(%arg0: i32) -> (i32, i32, i32) {
    %c0_i32 = arith.constant 0 : i32
    %c0_i32_0 = arith.constant 0 : i32
    %c0_i32_1 = arith.constant 0 : i32
    return %arg0, %c0_i32, %c0_i32_0 : i32, i32, i32
  }
  func.func @transform_1(%arg0: i32) -> (i32, i32) {
    %c0_i32 = arith.constant 0 : i32
    %c0_i32_0 = arith.constant 0 : i32
    %c0_i32_1 = arith.constant 0 : i32
    return %c0_i32, %c0_i32_0 : i32, i32
  }
  func.func @transform_2(%arg0: i32) -> (i32, i32) {
    %c0_i32 = arith.constant 0 : i32
    %c0_i32_0 = arith.constant 0 : i32
    %c0_i32_1 = arith.constant 0 : i32
    return %c0_i32, %c0_i32_0 : i32, i32
  }
  func.func @transform_3(%arg0: i32) -> (i32, i32) {
    %c0_i32 = arith.constant 0 : i32
    %c0_i32_0 = arith.constant 0 : i32
    return %arg0, %c0_i32 : i32, i32
  }
}

</mosaic_0001>

<llo_original>
// kernel: tpu_custom_call.1
$region0: #{tpu_custom_call.1}
  #allocation0 [shape = 'u32[]', space=smem, size = 0x4, offset = 0x4, fixed_abs, tag = 'smem constant byte address 0x4 - core index']
  #allocation1 [shape = 'u32[144,128]{1,0:T(1,128)}', space=vmem, size = 0x12000, scoped, tag = 'internal scratch']
  %s0 = inlined_call_operand.hbm [shape: f32[8,8,16], index: 0, kind: input, shape index: {}]
  %s1 = inlined_call_operand.hbm [shape: f32[48,128], index: 1, kind: input, shape index: {}]
  %s2 = inlined_call_operand.vmem [shape: f32[1,128], index: 2, kind: input, shape index: {}]
  %s3 = inlined_call_operand.hbm [shape: f32[8,128], index: 3, kind: output, shape index: {}]
  %s4 = sld [smem:[#allocation0]]
  $region30: #{tpu_custom_call.1} parent=0
    _
  %s6 = ssub.s32 1, %s4
  %s7 = scalar_select 0, %s6, %s4
  $region1: #{tpu_custom_call.1} parent=0
    #allocation2 [shape = 'u8[32768]{0}', space=vmem, size = 0x8000, scoped, tag = 'input window, operand 0, single buffered']
    #allocation3 [shape = 's32[1]{0}', space=sflag, size = 0x4, scoped, tag = 'scoped memory for tpu_custom_call.1']
    #allocation4 [shape = 's32[1]{0}', space=sflag, size = 0x4, scoped, tag = 'scoped memory for tpu_custom_call.1']
    #allocation5 [shape = 'u8[24576]{0}', space=vmem, size = 0x6000, scoped, tag = 'input window, operand 1, single buffered']
    #allocation6 [shape = 's32[1]{0}', space=sflag, size = 0x4, scoped, tag = 'scoped memory for tpu_custom_call.1']
    #allocation7 [shape = 'u8[4096]{0}', space=vmem, size = 0x1000, scoped, tag = 'output window, operand 0, single buffered']
    %8 = vsyncpa [#allocation3], 0
    %9 = vsyncpa [#allocation6], 0
    %10 = vsyncpa [#allocation4], 0
    // Predicated region
    $region2: #{tpu_custom_call.1} parent=1 // pred_check
      _
    $region3: #{tpu_custom_call.1} parent=1 // pred_check_branch
      %12 = sbr.rel (0) target = $region5
    $region4: #{tpu_custom_call.1} parent=1 // pred_region
      %s14 = ssub.s32 1024, 1024
      %15 = vsyncadd [#allocation3], %s14
      %s16 = sshll.u32 [#allocation2], 4
      %s17 = int_to_ptr.vmem [resolvable:$true] %s16
      %22 = dma.hbm_to_vmem [thread:$0]  %s0, 1024, %s17, [#allocation3], 128, 128, 8
    $region5: #{tpu_custom_call.1} parent=1 // pred_fallthru
      _
    // Predicated region
    $region6: #{tpu_custom_call.1} parent=1 // pred_check
      _
    $region7: #{tpu_custom_call.1} parent=1 // pred_check_branch
      %24 = sbr.rel (0) target = $region9
    $region8: #{tpu_custom_call.1} parent=1 // pred_region
      %s26 = ssub.s32 768, 768
      %27 = vsyncadd [#allocation6], %s26
      %s28 = sshll.u32 [#allocation5], 4
      %s29 = int_to_ptr.vmem [resolvable:$true] %s28
      %34 = dma.hbm_to_vmem [thread:$0]  %s1, 768, %s29, [#allocation6], 128, 128, 8
    $region9: #{tpu_custom_call.1} parent=1 // pred_fallthru
      _
    // Predicated region
    $region10: #{tpu_custom_call.1} parent=1 // pred_check
      _
    $region11: #{tpu_custom_call.1} parent=1 // pred_check_branch
      %36 = sbr.rel (0) target = $region13
    $region12: #{tpu_custom_call.1} parent=1 // pred_region
      _
    $region13: #{tpu_custom_call.1} parent=1 // pred_fallthru
      _
    // Predicated region
    $region14: #{tpu_custom_call.1} parent=1 // pred_check
      _
    $region15: #{tpu_custom_call.1} parent=1 // pred_check_branch
      %38 = sbr.rel (0) target = $region17
    $region16: #{tpu_custom_call.1} parent=1 // pred_region
      %39 = dma.done [#allocation3], 1024
    $region17: #{tpu_custom_call.1} parent=1 // pred_fallthru
      _
    // Predicated region
    $region18: #{tpu_custom_call.1} parent=1 // pred_check
      _
    $region19: #{tpu_custom_call.1} parent=1 // pred_check_branch
      %41 = sbr.rel (0) target = $region21
    $region20: #{tpu_custom_call.1} parent=1 // pred_region
      %42 = dma.done [#allocation6], 768
    $region21: #{tpu_custom_call.1} parent=1 // pred_fallthru
      _
    %v43 = vld [vmem:[#allocation2] sm:$0xff]
    %v44 = vld [vmem:[#allocation2 + $0x8] sm:$0xff]
    %v45 = vld [vmem:[#allocation2 + $0x10] sm:$0xff]
    %v46 = vld [vmem:[#allocation2 + $0x18] sm:$0xff]
    %v47 = vld [vmem:[#allocation2 + $0x20] sm:$0xff]
    %v48 = vld [vmem:[#allocation2 + $0x28] sm:$0xff]
    %v49 = vld [vmem:[#allocation2 + $0x30] sm:$0xff]
    %v50 = vld [vmem:[#allocation2 + $0x38] sm:$0xff]
    %v59 = vrot.slane %v43, 1
    %v60 = vrot.slane %v44, 1
    %v61 = vrot.slane %v45, 1
    %v62 = vrot.slane %v46, 1
    %v63 = vrot.slane %v47, 1
    %v64 = vrot.slane %v48, 1
    %v65 = vrot.slane %v49, 1
    %v66 = vrot.slane %v50, 1
    %67 = vrot.lane.b32.xlu0 %v59, 16
    %v68 = vpop.permute.xlu0 %67
    %69 = vrot.lane.b32.xlu0 %v60, 16
    %v70 = vpop.permute.xlu0 %69
    %71 = vrot.lane.b32.xlu0 %v61, 16
    %v72 = vpop.permute.xlu0 %71
    %73 = vrot.lane.b32.xlu0 %v62, 16
    %v74 = vpop.permute.xlu0 %73
    %75 = vrot.lane.b32.xlu0 %v63, 16
    %v76 = vpop.permute.xlu0 %75
    %77 = vrot.lane.b32.xlu0 %v64, 16
    %v78 = vpop.permute.xlu0 %77
    %79 = vrot.lane.b32.xlu0 %v65, 16
    %v80 = vpop.permute.xlu0 %79
    %81 = vrot.lane.b32.xlu0 %v66, 16
    %v82 = vpop.permute.xlu0 %81
    %v91 = vrot.slane %v43, 2
    %v92 = vrot.slane %v44, 2
    %v93 = vrot.slane %v45, 2
    %v94 = vrot.slane %v46, 2
    %v95 = vrot.slane %v47, 2
    %v96 = vrot.slane %v48, 2
    %v97 = vrot.slane %v49, 2
    %v98 = vrot.slane %v50, 2
    %99 = vrot.lane.b32.xlu0 %v91, 32
    %v100 = vpop.permute.xlu0 %99
    %101 = vrot.lane.b32.xlu0 %v92, 32
    %v102 = vpop.permute.xlu0 %101
    %103 = vrot.lane.b32.xlu0 %v93, 32
    %v104 = vpop.permute.xlu0 %103
    %105 = vrot.lane.b32.xlu0 %v94, 32
    %v106 = vpop.permute.xlu0 %105
    %107 = vrot.lane.b32.xlu0 %v95, 32
    %v108 = vpop.permute.xlu0 %107
    %109 = vrot.lane.b32.xlu0 %v96, 32
    %v110 = vpop.permute.xlu0 %109
    %111 = vrot.lane.b32.xlu0 %v97, 32
    %v112 = vpop.permute.xlu0 %111
    %113 = vrot.lane.b32.xlu0 %v98, 32
    %v114 = vpop.permute.xlu0 %113
    %vm123 = vcmask 130048
    %v124 = vsel %vm123, %v43, %v68
    %v125 = vsel %vm123, %v44, %v70
    %v126 = vsel %vm123, %v45, %v72
    %v127 = vsel %vm123, %v46, %v74
    %v128 = vsel %vm123, %v47, %v76
    %v129 = vsel %vm123, %v48, %v78
    %v130 = vsel %vm123, %v49, %v80
    %v131 = vsel %vm123, %v50, %v82
    %vm132 = vcmask 261120
    %v133 = vsel %vm132, %v124, %v100
    %v134 = vsel %vm132, %v125, %v102
    %v135 = vsel %vm132, %v126, %v104
    %v136 = vsel %vm132, %v127, %v106
    %v137 = vsel %vm132, %v128, %v108
    %v138 = vsel %vm132, %v129, %v110
    %v139 = vsel %vm132, %v130, %v112
    %v140 = vsel %vm132, %v131, %v114
    %v149 = vcombine.high %v133, %v133
    %v151 = vunpack.c.l.s4 1983009808
    %v152 = vunpack.c.0.s8 %v151
    %v153 = vlaneseq
    %v154 = vshrl.u32 %v153, 7
    %v155 = vsub.s32 %v152, %v154
    %v156 = vrot.slane %v133, %v155
    %v158 = vunpack.c.l.s4 1983009808
    %v159 = vunpack.c.0.s8 %v158
    %v160 = vlaneseq
    %v161 = vshrl.u32 %v160, 7
    %v162 = vsub.s32 %v159, %v161
    %v163 = vrot.slane %v149, %v162
    %v164 = vcombine.high %v156, %v156
    %v165 = vcombine.high %v134, %v134
    %v167 = vunpack.c.l.s4 1983009808
    %v168 = vunpack.c.0.s8 %v167
    %v169 = vlaneseq
    %v170 = vshrl.u32 %v169, 7
    %v171 = vsub.s32 %v168, %v170
    %v172 = vrot.slane %v134, %v171
    %v174 = vunpack.c.l.s4 1983009808
    %v175 = vunpack.c.0.s8 %v174
    %v176 = vlaneseq
    %v177 = vshrl.u32 %v176, 7
    %v178 = vsub.s32 %v175, %v177
    %v179 = vrot.slane %v165, %v178
    %v180 = vcombine.high %v172, %v172
    %v181 = vcombine.high %v135, %v135
    %v183 = vunpack.c.l.s4 1983009808
    %v184 = vunpack.c.0.s8 %v183
    %v185 = vlaneseq
    %v186 = vshrl.u32 %v185, 7
    %v187 = vsub.s32 %v184, %v186
    %v188 = vrot.slane %v135, %v187
    %v190 = vunpack.c.l.s4 1983009808
    %v191 = vunpack.c.0.s8 %v190
    %v192 = vlaneseq
    %v193 = vshrl.u32 %v192, 7
    %v194 = vsub.s32 %v191, %v193
    %v195 = vrot.slane %v181, %v194
    %v196 = vcombine.high %v188, %v188
    %v197 = vcombine.high %v136, %v136
    %v199 = vunpack.c.l.s4 1983009808
    %v200 = vunpack.c.0.s8 %v199
    %v201 = vlaneseq
    %v202 = vshrl.u32 %v201, 7
    %v203 = vsub.s32 %v200, %v202
    %v204 = vrot.slane %v136, %v203
    %v206 = vunpack.c.l.s4 1983009808
    %v207 = vunpack.c.0.s8 %v206
    %v208 = vlaneseq
    %v209 = vshrl.u32 %v208, 7
    %v210 = vsub.s32 %v207, %v209
    %v211 = vrot.slane %v197, %v210
    %v212 = vcombine.high %v204, %v204
    %v213 = vcombine.high %v137, %v137
    %v215 = vunpack.c.l.s4 1983009808
    %v216 = vunpack.c.0.s8 %v215
    %v217 = vlaneseq
    %v218 = vshrl.u32 %v217, 7
    %v219 = vsub.s32 %v216, %v218
    %v220 = vrot.slane %v137, %v219
    %v222 = vunpack.c.l.s4 1983009808
    %v223 = vunpack.c.0.s8 %v222
    %v224 = vlaneseq
    %v225 = vshrl.u32 %v224, 7
    %v226 = vsub.s32 %v223, %v225
    %v227 = vrot.slane %v213, %v226
    %v228 = vcombine.high %v220, %v220
    %v229 = vcombine.high %v138, %v138
    %v231 = vunpack.c.l.s4 1983009808
    %v232 = vunpack.c.0.s8 %v231
    %v233 = vlaneseq
    %v234 = vshrl.u32 %v233, 7
    %v235 = vsub.s32 %v232, %v234
    %v236 = vrot.slane %v138, %v235
    %v238 = vunpack.c.l.s4 1983009808
    %v239 = vunpack.c.0.s8 %v238
    %v240 = vlaneseq
    %v241 = vshrl.u32 %v240, 7
    %v242 = vsub.s32 %v239, %v241
    %v243 = vrot.slane %v229, %v242
    %v244 = vcombine.high %v236, %v236
    %v245 = vcombine.high %v139, %v139
    %v247 = vunpack.c.l.s4 1983009808
    %v248 = vunpack.c.0.s8 %v247
    %v249 = vlaneseq
    %v250 = vshrl.u32 %v249, 7
    %v251 = vsub.s32 %v248, %v250
    %v252 = vrot.slane %v139, %v251
    %v254 = vunpack.c.l.s4 1983009808
    %v255 = vunpack.c.0.s8 %v254
    %v256 = vlaneseq
    %v257 = vshrl.u32 %v256, 7
    %v258 = vsub.s32 %v255, %v257
    %v259 = vrot.slane %v245, %v258
    %v260 = vcombine.high %v252, %v252
    %v261 = vcombine.high %v140, %v140
    %v263 = vunpack.c.l.s4 1983009808
    %v264 = vunpack.c.0.s8 %v263
    %v265 = vlaneseq
    %v266 = vshrl.u32 %v265, 7
    %v267 = vsub.s32 %v264, %v266
    %v268 = vrot.slane %v140, %v267
    %v270 = vunpack.c.l.s4 1983009808
    %v271 = vunpack.c.0.s8 %v270
    %v272 = vlaneseq
    %v273 = vshrl.u32 %v272, 7
    %v274 = vsub.s32 %v271, %v273
    %v275 = vrot.slane %v261, %v274
    %v276 = vcombine.high %v268, %v268
    %v277 = vld [vmem:[#allocation5] sm:$0xff]
    %v278 = vld [vmem:[#allocation5 + $0x8] sm:$0xff]
    %v279 = vld [vmem:[#allocation5 + $0x10] sm:$0xff]
    %v280 = vld [vmem:[#allocation5 + $0x18] sm:$0xff]
    %v281 = vld [vmem:[#allocation5 + $0x20] sm:$0xff]
    %v282 = vld [vmem:[#allocation5 + $0x28] sm:$0xff]
    %v283 = vcombine.low %v156, %v164
    %v284 = vcombine.low %v163, %v172
    %v286 = vunpack.c.l.s4 1983009808
    %v287 = vunpack.c.0.s8 %v286
    %v288 = vlaneseq
    %v289 = vshrl.u32 %v288, 7
    %v290 = vsub.s32 %v287, %v289
    %v291 = vrot.slane %v283, %v290
    %v293 = vunpack.c.l.s4 1983009808
    %v294 = vunpack.c.0.s8 %v293
    %v295 = vlaneseq
    %v296 = vshrl.u32 %v295, 7
    %v297 = vsub.s32 %v294, %v296
    %v298 = vrot.slane %v284, %v297
    %v299 = vcombine.low %v291, %v298
    %v300 = vcombine.low %v180, %v179
    %v301 = vcombine.low %v188, %v196
    %v303 = vunpack.c.l.s4 1983009808
    %v304 = vunpack.c.0.s8 %v303
    %v305 = vlaneseq
    %v306 = vshrl.u32 %v305, 7
    %v307 = vsub.s32 %v304, %v306
    %v308 = vrot.slane %v300, %v307
    %v310 = vunpack.c.l.s4 1983009808
    %v311 = vunpack.c.0.s8 %v310
    %v312 = vlaneseq
    %v313 = vshrl.u32 %v312, 7
    %v314 = vsub.s32 %v311, %v313
    %v315 = vrot.slane %v301, %v314
    %v316 = vcombine.low %v308, %v315
    %v317 = vcombine.low %v195, %v204
    %v318 = vcombine.low %v212, %v211
    %v320 = vunpack.c.l.s4 1983009808
    %v321 = vunpack.c.0.s8 %v320
    %v322 = vlaneseq
    %v323 = vshrl.u32 %v322, 7
    %v324 = vsub.s32 %v321, %v323
    %v325 = vrot.slane %v317, %v324
    %v327 = vunpack.c.l.s4 1983009808
    %v328 = vunpack.c.0.s8 %v327
    %v329 = vlaneseq
    %v330 = vshrl.u32 %v329, 7
    %v331 = vsub.s32 %v328, %v330
    %v332 = vrot.slane %v318, %v331
    %v333 = vcombine.low %v325, %v332
    %v334 = vcombine.low %v220, %v228
    %v335 = vcombine.low %v227, %v236
    %v337 = vunpack.c.l.s4 1983009808
    %v338 = vunpack.c.0.s8 %v337
    %v339 = vlaneseq
    %v340 = vshrl.u32 %v339, 7
    %v341 = vsub.s32 %v338, %v340
    %v342 = vrot.slane %v334, %v341
    %v344 = vunpack.c.l.s4 1983009808
    %v345 = vunpack.c.0.s8 %v344
    %v346 = vlaneseq
    %v347 = vshrl.u32 %v346, 7
    %v348 = vsub.s32 %v345, %v347
    %v349 = vrot.slane %v335, %v348
    %v350 = vcombine.low %v342, %v349
    %v351 = vcombine.low %v244, %v243
    %v352 = vcombine.low %v252, %v260
    %v354 = vunpack.c.l.s4 1983009808
    %v355 = vunpack.c.0.s8 %v354
    %v356 = vlaneseq
    %v357 = vshrl.u32 %v356, 7
    %v358 = vsub.s32 %v355, %v357
    %v359 = vrot.slane %v351, %v358
    %v361 = vunpack.c.l.s4 1983009808
    %v362 = vunpack.c.0.s8 %v361
    %v363 = vlaneseq
    %v364 = vshrl.u32 %v363, 7
    %v365 = vsub.s32 %v362, %v364
    %v366 = vrot.slane %v352, %v365
    %v367 = vcombine.low %v359, %v366
    %v368 = vcombine.low %v259, %v268
    %v369 = vcombine.low %v276, %v275
    %v371 = vunpack.c.l.s4 1983009808
    %v372 = vunpack.c.0.s8 %v371
    %v373 = vlaneseq
    %v374 = vshrl.u32 %v373, 7
    %v375 = vsub.s32 %v372, %v374
    %v376 = vrot.slane %v368, %v375
    %v378 = vunpack.c.l.s4 1983009808
    %v379 = vunpack.c.0.s8 %v378
    %v380 = vlaneseq
    %v381 = vshrl.u32 %v380, 7
    %v382 = vsub.s32 %v379, %v381
    %v383 = vrot.slane %v369, %v382
    %v384 = vcombine.low %v376, %v383
    %vm385 = vcmask 392192
    %v386 = vsel %vm385, %v299, 0
    %v388 = vsel %vm385, %v316, 0
    %v390 = vsel %vm385, %v333, 0
    %v392 = vsel %vm385, %v350, 0
    %v394 = vsel %vm385, %v367, 0
    %v396 = vsel %vm385, %v384, 0
    %398 = vmatprep.subr.mxu0 0.0
    %399 = vmatpush1.msra.mxu0 %v277
    %400 = vmatprep.subr.mxu0 0.0
    %401 = vmatpush1.msra.mxu0 %v278
    %402 = vmatprep.subr.mxu0 0.0
    %403 = vmatpush1.msra.mxu0 %v279
    %404 = vmatprep.subr.mxu0 0.0
    %405 = vmatpush1.msra.mxu0 %v280
    %406 = vmatprep.subr.mxu0 0.0
    %407 = vmatpush1.msra.mxu0 %v281
    %408 = vmatprep.subr.mxu0 0.0
    %409 = vmatpush1.msra.mxu0 %v282
    %410 = vmatprep.subr.mxu0 0.0
    %411 = vmatpush1.msra.mxu0 0.0
    %412 = vmatprep.subr.mxu0 0.0
    %413 = vmatpush1.msra.mxu0 0.0
    %414 = vmatprep.subr.mxu0 0.0
    %415 = vmatpush1.msra.mxu0 0.0
    %416 = vmatprep.subr.mxu0 0.0
    %417 = vmatpush1.msra.mxu0 0.0
    %418 = vmatprep.subr.mxu0 0.0
    %419 = vmatpush1.msra.mxu0 0.0
    %420 = vmatprep.subr.mxu0 0.0
    %421 = vmatpush1.msra.mxu0 0.0
    %422 = vmatprep.subr.mxu0 0.0
    %423 = vmatpush1.msra.mxu0 0.0
    %424 = vmatprep.subr.mxu0 0.0
    %425 = vmatpush1.msra.mxu0 0.0
    %426 = vmatprep.subr.mxu0 0.0
    %427 = vmatpush1.msra.mxu0 0.0
    %428 = vmatprep.subr.mxu0 0.0
    %429 = vmatpush1.msra.mxu0 0.0
    %430 = vmatprep.subr.mxu0 0.0
    %431 = vmatpush1.msra.mxu0 0.0
    %432 = vmatprep.subr.mxu0 0.0
    %433 = vmatpush1.msra.mxu0 0.0
    %434 = vmatprep.subr.mxu0 0.0
    %435 = vmatpush1.msra.mxu0 0.0
    %436 = vmatprep.subr.mxu0 0.0
    %437 = vmatpush1.msra.mxu0 0.0
    %438 = vmatprep.subr.mxu0 0.0
    %439 = vmatpush1.msra.mxu0 0.0
    %440 = vmatprep.subr.mxu0 0.0
    %441 = vmatpush1.msra.mxu0 0.0
    %442 = vmatprep.subr.mxu0 0.0
    %443 = vmatpush1.msra.mxu0 0.0
    %444 = vmatprep.subr.mxu0 0.0
    %445 = vmatpush1.msra.mxu0 0.0
    %446 = vmatprep.subr.mxu0 0.0
    %447 = vmatpush1.msra.mxu0 0.0
    %448 = vmatprep.subr.mxu0 0.0
    %449 = vmatpush1.msra.mxu0 0.0
    %450 = vmatprep.subr.mxu0 0.0
    %451 = vmatpush1.msra.mxu0 0.0
    %452 = vmatprep.subr.mxu0 0.0
    %453 = vmatpush1.msra.mxu0 0.0
    %454 = vmatprep.subr.mxu0 0.0
    %455 = vmatpush1.msra.mxu0 0.0
    %456 = vmatprep.subr.mxu0 0.0
    %457 = vmatpush1.msra.mxu0 0.0
    %458 = vmatprep.subr.mxu0 0.0
    %459 = vmatpush1.msra.mxu0 0.0
    %460 = vmatprep.subr.mxu0 0.0
    %461 = vmatpush1.msra.mxu0 0.0
    %462 = vmatprep.mubr.f32.mxu0 0.0
    %463 = vmatmul.mubr.f32.gmra.mrb[0].mxu0 %v386
    %v464 = vpop.f32.mrb[0].mxu0
    %v465 = vadd.f32 0.0, %v464
    %v466 = vpop.f32.mrb[0].mxu0
    %467 = vmatprep.mubr.f32.mxu0 0.0
    %468 = vmatmul.mubr.f32.gmra.mrb[0].mxu0 %v388
    %v469 = vpop.f32.mrb[0].mxu0
    %v470 = vadd.f32 0.0, %v469
    %v471 = vpop.f32.mrb[0].mxu0
    %472 = vmatprep.mubr.f32.mxu0 0.0
    %473 = vmatmul.mubr.f32.gmra.mrb[0].mxu0 %v390
    %v474 = vpop.f32.mrb[0].mxu0
    %v475 = vadd.f32 0.0, %v474
    %v476 = vpop.f32.mrb[0].mxu0
    %477 = vmatprep.mubr.f32.mxu0 0.0
    %478 = vmatmul.mubr.f32.gmra.mrb[0].mxu0 %v392
    %v479 = vpop.f32.mrb[0].mxu0
    %v480 = vadd.f32 0.0, %v479
    %v481 = vpop.f32.mrb[0].mxu0
    %482 = vmatprep.mubr.f32.mxu0 0.0
    %483 = vmatmul.mubr.f32.gmra.mrb[0].mxu0 %v394
    %v484 = vpop.f32.mrb[0].mxu0
    %v485 = vadd.f32 0.0, %v484
    %v486 = vpop.f32.mrb[0].mxu0
    %487 = vmatprep.mubr.f32.mxu0 0.0
    %488 = vmatmul.mubr.f32.gmra.mrb[0].mxu0 %v396
    %v489 = vpop.f32.mrb[0].mxu0
    %v490 = vadd.f32 0.0, %v489
    %v491 = vpop.f32.mrb[0].mxu0
    %492 = vdwg.mxu0
    %v499 = vcombine.high %v465, %v465
    %v501 = vunpack.c.l.s4 1983009808
    %v502 = vunpack.c.0.s8 %v501
    %v503 = vlaneseq
    %v504 = vshrl.u32 %v503, 7
    %v505 = vsub.s32 %v502, %v504
    %v506 = vrot.slane %v465, %v505
    %v508 = vunpack.c.l.s4 1983009808
    %v509 = vunpack.c.0.s8 %v508
    %v510 = vlaneseq
    %v511 = vshrl.u32 %v510, 7
    %v512 = vsub.s32 %v509, %v511
    %v513 = vrot.slane %v499, %v512
    %v514 = vcombine.high %v506, %v506
    %v515 = vcombine.high %v513, %v513
    %v516 = vcombine.high %v470, %v470
    %v518 = vunpack.c.l.s4 1983009808
    %v519 = vunpack.c.0.s8 %v518
    %v520 = vlaneseq
    %v521 = vshrl.u32 %v520, 7
    %v522 = vsub.s32 %v519, %v521
    %v523 = vrot.slane %v470, %v522
    %v525 = vunpack.c.l.s4 1983009808
    %v526 = vunpack.c.0.s8 %v525
    %v527 = vlaneseq
    %v528 = vshrl.u32 %v527, 7
    %v529 = vsub.s32 %v526, %v528
    %v530 = vrot.slane %v516, %v529
    %v531 = vcombine.high %v523, %v523
    %v532 = vcombine.high %v530, %v530
    %v533 = vcombine.high %v475, %v475
    %v535 = vunpack.c.l.s4 1983009808
    %v536 = vunpack.c.0.s8 %v535
    %v537 = vlaneseq
    %v538 = vshrl.u32 %v537, 7
    %v539 = vsub.s32 %v536, %v538
    %v540 = vrot.slane %v475, %v539
    %v542 = vunpack.c.l.s4 1983009808
    %v543 = vunpack.c.0.s8 %v542
    %v544 = vlaneseq
    %v545 = vshrl.u32 %v544, 7
    %v546 = vsub.s32 %v543, %v545
    %v547 = vrot.slane %v533, %v546
    %v548 = vcombine.high %v540, %v540
    %v549 = vcombine.high %v547, %v547
    %v550 = vcombine.high %v480, %v480
    %v552 = vunpack.c.l.s4 1983009808
    %v553 = vunpack.c.0.s8 %v552
    %v554 = vlaneseq
    %v555 = vshrl.u32 %v554, 7
    %v556 = vsub.s32 %v553, %v555
    %v557 = vrot.slane %v480, %v556
    %v559 = vunpack.c.l.s4 1983009808
    %v560 = vunpack.c.0.s8 %v559
    %v561 = vlaneseq
    %v562 = vshrl.u32 %v561, 7
    %v563 = vsub.s32 %v560, %v562
    %v564 = vrot.slane %v550, %v563
    %v565 = vcombine.high %v557, %v557
    %v566 = vcombine.high %v564, %v564
    %v567 = vcombine.high %v485, %v485
    %v569 = vunpack.c.l.s4 1983009808
    %v570 = vunpack.c.0.s8 %v569
    %v571 = vlaneseq
    %v572 = vshrl.u32 %v571, 7
    %v573 = vsub.s32 %v570, %v572
    %v574 = vrot.slane %v485, %v573
    %v576 = vunpack.c.l.s4 1983009808
    %v577 = vunpack.c.0.s8 %v576
    %v578 = vlaneseq
    %v579 = vshrl.u32 %v578, 7
    %v580 = vsub.s32 %v577, %v579
    %v581 = vrot.slane %v567, %v580
    %v582 = vcombine.high %v574, %v574
    %v583 = vcombine.high %v581, %v581
    %v584 = vcombine.high %v490, %v490
    %v586 = vunpack.c.l.s4 1983009808
    %v587 = vunpack.c.0.s8 %v586
    %v588 = vlaneseq
    %v589 = vshrl.u32 %v588, 7
    %v590 = vsub.s32 %v587, %v589
    %v591 = vrot.slane %v490, %v590
    %v593 = vunpack.c.l.s4 1983009808
    %v594 = vunpack.c.0.s8 %v593
    %v595 = vlaneseq
    %v596 = vshrl.u32 %v595, 7
    %v597 = vsub.s32 %v594, %v596
    %v598 = vrot.slane %v584, %v597
    %v599 = vcombine.high %v591, %v591
    %v600 = vcombine.high %v598, %v598
    %v601 = vcombine.low %v506, %v514
    %v603 = vunpack.c.l.s4 1983009808
    %v604 = vunpack.c.0.s8 %v603
    %v605 = vlaneseq
    %v606 = vshrl.u32 %v605, 7
    %v607 = vsub.s32 %v604, %v606
    %v608 = vrot.slane %v601, %v607
    %v610 = vunpack.c.l.s4 1983009808
    %v611 = vunpack.c.0.s8 %v610
    %v612 = vlaneseq
    %v613 = vshrl.u32 %v612, 7
    %v614 = vsub.s32 %v611, %v613
    %v615 = vrot.slane %v513, %v614
    %v616 = vcombine.low %v608, %v615
    %v617 = vcombine.low %v515, %v523
    %v619 = vunpack.c.l.s4 1983009808
    %v620 = vunpack.c.0.s8 %v619
    %v621 = vlaneseq
    %v622 = vshrl.u32 %v621, 7
    %v623 = vsub.s32 %v620, %v622
    %v624 = vrot.slane %v617, %v623
    %v626 = vunpack.c.l.s4 1983009808
    %v627 = vunpack.c.0.s8 %v626
    %v628 = vlaneseq
    %v629 = vshrl.u32 %v628, 7
    %v630 = vsub.s32 %v627, %v629
    %v631 = vrot.slane %v531, %v630
    %v632 = vcombine.low %v624, %v631
    %v633 = vcombine.low %v530, %v532
    %v635 = vunpack.c.l.s4 1983009808
    %v636 = vunpack.c.0.s8 %v635
    %v637 = vlaneseq
    %v638 = vshrl.u32 %v637, 7
    %v639 = vsub.s32 %v636, %v638
    %v640 = vrot.slane %v633, %v639
    %v642 = vunpack.c.l.s4 1983009808
    %v643 = vunpack.c.0.s8 %v642
    %v644 = vlaneseq
    %v645 = vshrl.u32 %v644, 7
    %v646 = vsub.s32 %v643, %v645
    %v647 = vrot.slane %v540, %v646
    %v648 = vcombine.low %v640, %v647
    %v649 = vcombine.low %v548, %v547
    %v651 = vunpack.c.l.s4 1983009808
    %v652 = vunpack.c.0.s8 %v651
    %v653 = vlaneseq
    %v654 = vshrl.u32 %v653, 7
    %v655 = vsub.s32 %v652, %v654
    %v656 = vrot.slane %v649, %v655
    %v658 = vunpack.c.l.s4 1983009808
    %v659 = vunpack.c.0.s8 %v658
    %v660 = vlaneseq
    %v661 = vshrl.u32 %v660, 7
    %v662 = vsub.s32 %v659, %v661
    %v663 = vrot.slane %v549, %v662
    %v664 = vcombine.low %v656, %v663
    %v665 = vcombine.low %v557, %v565
    %v667 = vunpack.c.l.s4 1983009808
    %v668 = vunpack.c.0.s8 %v667
    %v669 = vlaneseq
    %v670 = vshrl.u32 %v669, 7
    %v671 = vsub.s32 %v668, %v670
    %v672 = vrot.slane %v665, %v671
    %v674 = vunpack.c.l.s4 1983009808
    %v675 = vunpack.c.0.s8 %v674
    %v676 = vlaneseq
    %v677 = vshrl.u32 %v676, 7
    %v678 = vsub.s32 %v675, %v677
    %v679 = vrot.slane %v564, %v678
    %v680 = vcombine.low %v672, %v679
    %v681 = vcombine.low %v566, %v574
    %v683 = vunpack.c.l.s4 1983009808
    %v684 = vunpack.c.0.s8 %v683
    %v685 = vlaneseq
    %v686 = vshrl.u32 %v685, 7
    %v687 = vsub.s32 %v684, %v686
    %v688 = vrot.slane %v681, %v687
    %v690 = vunpack.c.l.s4 1983009808
    %v691 = vunpack.c.0.s8 %v690
    %v692 = vlaneseq
    %v693 = vshrl.u32 %v692, 7
    %v694 = vsub.s32 %v691, %v693
    %v695 = vrot.slane %v582, %v694
    %v696 = vcombine.low %v688, %v695
    %v697 = vcombine.low %v581, %v583
    %v699 = vunpack.c.l.s4 1983009808
    %v700 = vunpack.c.0.s8 %v699
    %v701 = vlaneseq
    %v702 = vshrl.u32 %v701, 7
    %v703 = vsub.s32 %v700, %v702
    %v704 = vrot.slane %v697, %v703
    %v706 = vunpack.c.l.s4 1983009808
    %v707 = vunpack.c.0.s8 %v706
    %v708 = vlaneseq
    %v709 = vshrl.u32 %v708, 7
    %v710 = vsub.s32 %v707, %v709
    %v711 = vrot.slane %v591, %v710
    %v712 = vcombine.low %v704, %v711
    %v713 = vcombine.low %v599, %v598
    %v715 = vunpack.c.l.s4 1983009808
    %v716 = vunpack.c.0.s8 %v715
    %v717 = vlaneseq
    %v718 = vshrl.u32 %v717, 7
    %v719 = vsub.s32 %v716, %v718
    %v720 = vrot.slane %v713, %v719
    %v722 = vunpack.c.l.s4 1983009808
    %v723 = vunpack.c.0.s8 %v722
    %v724 = vlaneseq
    %v725 = vshrl.u32 %v724, 7
    %v726 = vsub.s32 %v723, %v725
    %v727 = vrot.slane %v600, %v726
    %v728 = vcombine.low %v720, %v727
    %vm737 = vcmask 1045504
    %v738 = vsel %vm737, %v616, -inf
    %v739 = vrot.slane %v738, 4
    %v740 = vmax.f32 %v738, %v739
    %v741 = vrot.slane %v740, 2
    %v742 = vmax.f32 %v740, %v741
    %v743 = vrot.slane %v742, 1
    %v744 = vmax.f32 %v742, %v743
    %v745 = vsel %vm737, %v632, -inf
    %v746 = vrot.slane %v745, 4
    %v747 = vmax.f32 %v745, %v746
    %v748 = vrot.slane %v747, 2
    %v749 = vmax.f32 %v747, %v748
    %v750 = vrot.slane %v749, 1
    %v751 = vmax.f32 %v749, %v750
    %v752 = vsel %vm737, %v648, -inf
    %v753 = vrot.slane %v752, 4
    %v754 = vmax.f32 %v752, %v753
    %v755 = vrot.slane %v754, 2
    %v756 = vmax.f32 %v754, %v755
    %v757 = vrot.slane %v756, 1
    %v758 = vmax.f32 %v756, %v757
    %v759 = vsel %vm737, %v664, -inf
    %v760 = vrot.slane %v759, 4
    %v761 = vmax.f32 %v759, %v760
    %v762 = vrot.slane %v761, 2
    %v763 = vmax.f32 %v761, %v762
    %v764 = vrot.slane %v763, 1
    %v765 = vmax.f32 %v763, %v764
    %v766 = vsel %vm737, %v680, -inf
    %v767 = vrot.slane %v766, 4
    %v768 = vmax.f32 %v766, %v767
    %v769 = vrot.slane %v768, 2
    %v770 = vmax.f32 %v768, %v769
    %v771 = vrot.slane %v770, 1
    %v772 = vmax.f32 %v770, %v771
    %v773 = vsel %vm737, %v696, -inf
    %v774 = vrot.slane %v773, 4
    %v775 = vmax.f32 %v773, %v774
    %v776 = vrot.slane %v775, 2
    %v777 = vmax.f32 %v775, %v776
    %v778 = vrot.slane %v777, 1
    %v779 = vmax.f32 %v777, %v778
    %v780 = vsel %vm737, %v712, -inf
    %v781 = vrot.slane %v780, 4
    %v782 = vmax.f32 %v780, %v781
    %v783 = vrot.slane %v782, 2
    %v784 = vmax.f32 %v782, %v783
    %v785 = vrot.slane %v784, 1
    %v786 = vmax.f32 %v784, %v785
    %v787 = vsel %vm737, %v728, -inf
    %v788 = vrot.slane %v787, 4
    %v789 = vmax.f32 %v787, %v788
    %v790 = vrot.slane %v789, 2
    %v791 = vmax.f32 %v789, %v790
    %v792 = vrot.slane %v791, 1
    %v793 = vmax.f32 %v791, %v792
    %v794 = vld [vmem:[%s2] sm:$0x1]
    %v796 = vlaneseq
    %v797 = vshrl.u32 %v796, 7
    %v798 = vsub.s32 0, %v797
    %v799 = vrot.slane %v794, %v798
    %v801 = vadd.f32 %v744, %v799
    %v802 = vadd.f32 %v751, %v799
    %v803 = vadd.f32 %v758, %v799
    %v804 = vadd.f32 %v765, %v799
    %v805 = vadd.f32 %v772, %v799
    %v806 = vadd.f32 %v779, %v799
    %v807 = vadd.f32 %v786, %v799
    %v808 = vadd.f32 %v793, %v799
    %v809 = vmax.f32 %v801, 0.0
    %v810 = vmax.f32 %v802, 0.0
    %v811 = vmax.f32 %v803, 0.0
    %v812 = vmax.f32 %v804, 0.0
    %v813 = vmax.f32 %v805, 0.0
    %v814 = vmax.f32 %v806, 0.0
    %v815 = vmax.f32 %v807, 0.0
    %v816 = vmax.f32 %v808, 0.0
    %v825 = vrot.slane %v810, 7
    %vm826 = vcmask 1041409
    %v827 = vsel %vm826, %v825, %v809
    %v828 = vrot.slane %v811, 6
    %vm829 = vcmask 1042434
    %v830 = vsel %vm829, %v828, %v827
    %v831 = vrot.slane %v812, 5
    %vm832 = vcmask 1043459
    %v833 = vsel %vm832, %v831, %v830
    %v834 = vrot.slane %v813, 4
    %vm835 = vcmask 1044484
    %v836 = vsel %vm835, %v834, %v833
    %v837 = vrot.slane %v814, 3
    %vm838 = vcmask 1045509
    %v839 = vsel %vm838, %v837, %v836
    %v840 = vrot.slane %v815, 2
    %vm841 = vcmask 1046534
    %v842 = vsel %vm841, %v840, %v839
    %v843 = vrot.slane %v816, 1
    %vm844 = vcmask 1047559
    %v845 = vsel %vm844, %v843, %v842
    %847 = vst [vmem:[#allocation7] sm:$0xff] %v845
    // Predicated region
    $region22: #{tpu_custom_call.1} parent=1 // pred_check
      _
    $region23: #{tpu_custom_call.1} parent=1 // pred_check_branch
      %849 = sbr.rel (0) target = $region25
    $region24: #{tpu_custom_call.1} parent=1 // pred_region
      %s851 = ssub.s32 128, 128
      %852 = vsyncadd [#allocation4], %s851
      %s854 = sshll.u32 [#allocation7], 4
      %s855 = int_to_ptr.vmem [resolvable:$true] %s854
      %857 = dma.vmem_to_hbm [thread:$0]  %s855, 128, %s3, [#allocation4]
    $region25: #{tpu_custom_call.1} parent=1 // pred_fallthru
      _
    // Predicated region
    $region26: #{tpu_custom_call.1} parent=1 // pred_check
      _
    $region27: #{tpu_custom_call.1} parent=1 // pred_check_branch
      %859 = sbr.rel (0) target = $region29
    $region28: #{tpu_custom_call.1} parent=1 // pred_region
      %860 = dma.done [#allocation4], 128
    $region29: #{tpu_custom_call.1} parent=1 // pred_fallthru
      _
    %861 = vsyncpa [#allocation3], 1
    %862 = vsyncpa [#allocation6], 1
    %863 = vsyncpa [#allocation4], 1

</llo_original>
